<compile_context>
chip_gen: v7x
topology: tpu7x:2x2x1
jax: 0.10.0
libtpu: 0.0.40
codegen_flags: <defaults>
</compile_context>

<pallas_src>
import functools

import jax
import jax.numpy as jnp
import numpy as np
from jax import lax
from jax.experimental import pallas as pl
from jax.experimental.pallas import tpu as pltpu

_MIB = 1024 * 1024
_SPATIAL_QUANTUM = 8 * 128  # one (8, 128) f32 vreg worth of spatial columns


def _round_up(a, b):
    return (a + b - 1) // b * b


def _sublane_quantum(dtype):
    # Minimum sublane tile: 8 rows for 4-byte, 16 for 2-byte, 32 for 1-byte dtypes.
    return 8 * max(1, 4 // jnp.dtype(dtype).itemsize)


def _vmem_capacity_bytes():
    try:
        info = pltpu.get_tpu_info()
        for name in ("vmem_capacity_bytes", "vmem_bytes", "vmem_size_bytes"):
            v = getattr(info, name, None)
            if v:
                return int(v)
    except Exception:
        pass
    return 64 * _MIB  # conservative default (v7x-class per-core VMEM)


# ----------------------------------------------------------------------------
# Path 1: full channel axis in one block (small / medium class counts).
# ----------------------------------------------------------------------------
def _ce_kernel_full_c(x_ref, t_ref, o_ref, acc_ref, *, s_total, tile_s,
                      n_half, n_tiles, has_tail, may_dup):
    """grid = (split, B, spatial-tile); axis 2 is the reduction axis.

    x_ref:   (1, C, tile_s)  logits block, native dtype
    t_ref:   (1, 1, tile_s)  int32 class indices
    o_ref:   (1, 1, 8, 128)  per-(split, batch) loss sum (written at segment end)
    acc_ref: (1, tile_s)     f32 lane-distributed running sum (scratch)
    """
    p = pl.program_id(0)
    s = pl.program_id(2)
    logical = p * n_half + s  # logical spatial-tile index

    @pl.when(s == 0)
    def _reset_acc():
        acc_ref[...] = jnp.zeros(acc_ref.shape, acc_ref.dtype)

    x = x_ref[0]                      # (C, tile_s), native dtype
    t = t_ref[0]                      # (1, tile_s), int32
    num_classes = x.shape[0]

    # (C, 1) channel iota; the compare broadcasts against t along lanes.
    cls = lax.broadcasted_iota(jnp.int32, (num_classes, 1), 0)

    # Native-dtype max and one-hot gather (both exact); f32 only on exp/log path.
    m = jnp.max(x, axis=0, keepdims=True)                               # (1, tile_s)
    x_t = jnp.sum(jnp.where(cls == t, x, jnp.zeros((), x.dtype)),
                  axis=0, keepdims=True).astype(jnp.float32)            # (1, tile_s)
    ex = jnp.exp((x - m).astype(jnp.float32))                           # (C, tile_s)
    lse = m.astype(jnp.float32) + jnp.log(jnp.sum(ex, axis=0, keepdims=True))
    loss = lse - x_t                                                    # (1, tile_s) f32

    if has_tail or may_dup:
        # Only the last logical tile pays the tail mask; duplicated (over-split)
        # tiles (logical >= n_tiles) contribute nothing at all.
        @pl.when(logical < n_tiles - 1)
        def _interior():
            acc_ref[...] += loss

        @pl.when(logical == n_tiles - 1)
        def _last():
            col = (n_tiles - 1) * tile_s + lax.broadcasted_iota(
                jnp.int32, loss.shape, 1)
            acc_ref[...] += jnp.where(col < s_total, loss, 0.0)
    else:
        acc_ref[...] += loss

    @pl.when(s == n_half - 1)
    def _finalize():
        total = jnp.sum(acc_ref[...], axis=-1, keepdims=True)           # (1, 1)
        o_ref[...] = total + jnp.zeros(o_ref.shape, jnp.float32)


def _ce_full_c(x, t, *, B, C, S, tile_s, vmem_limit):
    n_tiles = pl.cdiv(S, tile_s)
    # 2-way spatial split only when needed for v7x megacore balance (odd B).
    split = 2 if (n_tiles >= 2 and B % 2 == 1) else 1
    n_half = pl.cdiv(n_tiles, split)
    has_tail = (S % tile_s) != 0
    may_dup = split * n_half > n_tiles

    def in_map(p, b, s):
        # Clamp so no block is fully out of bounds; duplicated tiles are
        # skipped in-kernel (nothing accumulated).
        return (b, 0, jnp.minimum(p * n_half + s, n_tiles - 1))

    kernel = functools.partial(
        _ce_kernel_full_c, s_total=S, tile_s=tile_s, n_half=n_half,
        n_tiles=n_tiles, has_tail=has_tail, may_dup=may_dup)

    out = pl.pallas_call(
        kernel,
        out_shape=jax.ShapeDtypeStruct((split, B, 8, 128), jnp.float32),
        grid_spec=pltpu.PrefetchScalarGridSpec(
            num_scalar_prefetch=0,
            grid=(split, B, n_half),
            in_specs=[
                pl.BlockSpec((1, C, tile_s), in_map),
                pl.BlockSpec((1, 1, tile_s), in_map),
            ],
            out_specs=pl.BlockSpec((1, 1, 8, 128), lambda p, b, s: (p, b, 0, 0)),
            scratch_shapes=[pltpu.VMEM((1, tile_s), jnp.float32)],
        ),
        compiler_params=pltpu.CompilerParams(
            dimension_semantics=("parallel", "parallel", "arbitrary"),
            vmem_limit_bytes=vmem_limit,
        ),
    )(x, t)
    return jnp.sum(out[:, :, 0, 0]) / (B * S)


# ----------------------------------------------------------------------------
# Path 2: channel-blocked online logsumexp (large class counts).
# ----------------------------------------------------------------------------
def _ce_kernel_blocked_c(x_ref, t_ref, o_ref, m_ref, l_ref, xt_ref, acc_ref, *,
                         s_total, c_total, tile_s, tile_c, n_s, n_c, has_tail):
    """grid = (B, spatial-tile, channel-tile); both trailing axes reduce.

    x_ref:   (1, tile_c, tile_s)  logits block, native dtype
    t_ref:   (1, 1, tile_s)       int32 class indices
    o_ref:   (1, 8, 128)          per-batch loss sum (written at segment end)
    m/l/xt:  (1, tile_s) f32      running max / sum-exp / target-logit scratch
    acc_ref: (1, tile_s) f32      lane-distributed running loss sum (scratch)
    """
    s = pl.program_id(1)
    c = pl.program_id(2)

    @pl.when(jnp.logical_and(s == 0, c == 0))
    def _reset_batch():
        acc_ref[...] = jnp.zeros(acc_ref.shape, acc_ref.dtype)

    @pl.when(c == 0)
    def _reset_column_stats():
        m_ref[...] = jnp.full(m_ref.shape, -jnp.inf, m_ref.dtype)
        l_ref[...] = jnp.zeros(l_ref.shape, l_ref.dtype)
        xt_ref[...] = jnp.zeros(xt_ref.shape, xt_ref.dtype)

    x = x_ref[0]                      # (tile_c, tile_s), native dtype
    t = t_ref[0]                      # (1, tile_s), int32
    cls = c * tile_c + lax.broadcasted_iota(jnp.int32, (tile_c, 1), 0)

    if c_total % tile_c != 0:
        # The last channel block overruns C; mask the undefined rows.
        x = jnp.where(cls < c_total, x,
                      jnp.asarray(jnp.finfo(x.dtype).min, x.dtype))

    blk_max = jnp.max(x, axis=0, keepdims=True).astype(jnp.float32)     # (1, tile_s)
    x_sel = jnp.sum(jnp.where(cls == t, x, jnp.zeros((), x.dtype)),
                    axis=0, keepdims=True).astype(jnp.float32)          # (1, tile_s)

    # Online (flash-softmax style) logsumexp update.
    m_prev = m_ref[...]
    m_new = jnp.maximum(m_prev, blk_max)
    ex = jnp.exp(x.astype(jnp.float32) - m_new)                         # (tile_c, tile_s)
    l_ref[...] = l_ref[...] * jnp.exp(m_prev - m_new) + jnp.sum(
        ex, axis=0, keepdims=True)
    m_ref[...] = m_new
    xt_ref[...] += x_sel

    last_c = c == n_c - 1

    def _loss():
        return (m_ref[...] + jnp.log(l_ref[...])) - xt_ref[...]

    if has_tail:
        @pl.when(jnp.logical_and(last_c, s < n_s - 1))
        def _interior():
            acc_ref[...] += _loss()

        @pl.when(jnp.logical_and(last_c, s == n_s - 1))
        def _tail():
            loss = _loss()
            col = (n_s - 1) * tile_s + lax.broadcasted_iota(
                jnp.int32, loss.shape, 1)
            acc_ref[...] += jnp.where(col < s_total, loss, 0.0)
    else:
        @pl.when(last_c)
        def _acc():
            acc_ref[...] += _loss()

    @pl.when(jnp.logical_and(last_c, s == n_s - 1))
    def _finalize():
        total = jnp.sum(acc_ref[...], axis=-1, keepdims=True)           # (1, 1)
        o_ref[...] = total + jnp.zeros(o_ref.shape, jnp.float32)


def _ce_blocked_c(x, t, *, B, C, S, tile_s, tile_c, vmem_limit):
    n_s = pl.cdiv(S, tile_s)
    n_c = pl.cdiv(C, tile_c)
    has_tail = (S % tile_s) != 0

    kernel = functools.partial(
        _ce_kernel_blocked_c, s_total=S, c_total=C, tile_s=tile_s,
        tile_c=tile_c, n_s=n_s, n_c=n_c, has_tail=has_tail)

    out = pl.pallas_call(
        kernel,
        out_shape=jax.ShapeDtypeStruct((B, 8, 128), jnp.float32),
        grid_spec=pltpu.PrefetchScalarGridSpec(
            num_scalar_prefetch=0,
            grid=(B, n_s, n_c),
            in_specs=[
                pl.BlockSpec((1, tile_c, tile_s), lambda b, s, c: (b, c, s)),
                pl.BlockSpec((1, 1, tile_s), lambda b, s, c: (b, 0, s)),
            ],
            out_specs=pl.BlockSpec((1, 8, 128), lambda b, s, c: (b, 0, 0)),
            scratch_shapes=[pltpu.VMEM((1, tile_s), jnp.float32)] * 4,
        ),
        compiler_params=pltpu.CompilerParams(
            dimension_semantics=("parallel", "arbitrary", "arbitrary"),
            vmem_limit_bytes=vmem_limit,
        ),
    )(x, t)
    return jnp.sum(out[:, 0, 0]) / (B * S)


# ----------------------------------------------------------------------------
# Public wrapper.
# ----------------------------------------------------------------------------
def cross_entropy_loss(predictions, targets):
    """nn.CrossEntropyLoss(reduction='mean') forward with class-index targets.

    predictions: (B, C, *spatial) float logits (f32 or bf16; cast in-kernel)
    targets:     (B, *spatial) integer class indices in [0, C)
    """
    assert predictions.ndim >= 2, "expected (B, C, *spatial) logits"
    assert jnp.issubdtype(predictions.dtype, jnp.floating)
    B, C = int(predictions.shape[0]), int(predictions.shape[1])
    spatial = tuple(int(d) for d in predictions.shape[2:])
    assert targets.shape == (B,) + spatial
    assert jnp.issubdtype(targets.dtype, jnp.integer), "class-index targets expected"

    S = 1
    for d in spatial:
        S *= d

    # Metadata-only reshapes; logits stay in their native dtype.
    x = predictions.reshape(B, C, S)
    t = targets.reshape(B, 1, S)
    if t.dtype != jnp.int32:
        t = t.astype(jnp.int32)       # tiny array; usually already int32

    itemsize = jnp.dtype(x.dtype).itemsize
    c_pad = _round_up(C, _sublane_quantum(x.dtype))   # sublane-padded channel rows
    s_pad = _round_up(S, _SPATIAL_QUANTUM)

    # Per-chip budgets: v5e/v6e have 128 MiB VMEM per core, v7x has 64 MiB.
    vmem_cap = _vmem_capacity_bytes()
    if vmem_cap >= 96 * _MIB:
        pipeline_budget, vmem_limit = 24 * _MIB, 64 * _MIB
    else:
        pipeline_budget, vmem_limit = 10 * _MIB, 32 * _MIB

    # Bytes per spatial column for the full-channel path: double-buffered native
    # logits + f32 elementwise temporaries + 8-sublane-padded int32 targets
    # (double-buffered) + the f32 accumulator scratch.
    lane_bytes_full = 2 * c_pad * itemsize + 2 * c_pad * 4 + 2 * 8 * 4 + 8 * 4
    tile_s_full = ((pipeline_budget // lane_bytes_full)
                   // _SPATIAL_QUANTUM * _SPATIAL_QUANTUM)

    if tile_s_full >= _SPATIAL_QUANTUM:
        # Small / medium class count: whole channel axis in one block.
        tile_s = min(tile_s_full, 32 * 1024, s_pad)
        return _ce_full_c(x, t, B=B, C=C, S=S, tile_s=tile_s,
                          vmem_limit=vmem_limit)

    # Large class count: channel-blocked online logsumexp keeps the spatial tile
    # lane-dense while the logits working set stays within VMEM.
    tile_s = min(2 * _SPATIAL_QUANTUM, s_pad)
    cq = _sublane_quantum(x.dtype)
    per_lane = pipeline_budget // tile_s - (2 * 8 * 4 + 4 * 8 * 4)
    tile_c = max(cq, per_lane // (2 * itemsize + 2 * 4) // cq * cq)
    tile_c = min(tile_c, c_pad)
    # TODO(synk): ignore_index=-100, class weights, label smoothing and soft
    # (probability) targets of nn.CrossEntropyLoss are not handled; all targets
    # are assumed to be valid class indices.
    return _ce_blocked_c(x, t, B=B, C=C, S=S, tile_s=tile_s, tile_c=tile_c,
                         vmem_limit=vmem_limit)


def _ce_ref(predictions, targets):
    """Pure-JAX reference of nn.CrossEntropyLoss(reduction='mean') forward."""
    B, C = predictions.shape[0], predictions.shape[1]
    x = predictions.reshape(B, C, -1).astype(jnp.float32)
    t = targets.reshape(B, -1)
    logp = jax.nn.log_softmax(x, axis=1)
    nll = -jnp.take_along_axis(logp, t[:, None, :], axis=1)[:, 0, :]
    return jnp.mean(nll)


if __name__ == "__main__":
    key = jax.random.PRNGKey(0)
    k1, k2, k3, k4 = jax.random.split(key, 4)

    # Test 1: typical (small) 3-D segmentation shapes -> full-channel path.
    B, C, D, H, W = 2, 4, 8, 16, 16
    predictions = jax.random.normal(k1, (B, C, D, H, W), dtype=jnp.float32)
    targets = jax.random.randint(k2, (B, D, H, W), 0, C, dtype=jnp.int32)

    loss = cross_entropy_loss(predictions, targets)
    jax.block_until_ready(loss)
    np.testing.assert_allclose(np.asarray(loss),
                               np.asarray(_ce_ref(predictions, targets)),
                               rtol=1e-5, atol=1e-5)

    # Test 2: force the channel-blocked (online-logsumexp) path with ragged
    # channel and spatial tails to cover the large-class-count code path.
    B2, C2 = 2, 21
    sp2 = (5, 17, 29)
    S2 = sp2[0] * sp2[1] * sp2[2]
    predictions2 = jax.random.normal(k3, (B2, C2) + sp2, dtype=jnp.float32)
    targets2 = jax.random.randint(k4, (B2,) + sp2, 0, C2, dtype=jnp.int32)

    loss2 = _ce_blocked_c(predictions2.reshape(B2, C2, S2),
                          targets2.reshape(B2, 1, S2),
                          B=B2, C=C2, S=S2, tile_s=1024, tile_c=8,
                          vmem_limit=32 * _MIB)
    jax.block_until_ready(loss2)
    np.testing.assert_allclose(np.asarray(loss2),
                               np.asarray(_ce_ref(predictions2, targets2)),
                               rtol=1e-5, atol=1e-5)

    print("KERNEL_OK")
</pallas_src>

<mosaic_0001>
module attributes {stable_mosaic.version = 11 : i64} {
  func.func @_ce_kernel_full_c(%arg0: i32, %arg1: i32, %arg2: i32, %arg3: memref<1x4x2048xf32, #tpu.memory_space<vmem>>, %arg4: memref<1x1x2048xi32, #tpu.memory_space<vmem>>, %arg5: memref<1x1x8x128xf32, #tpu.memory_space<vmem>>, %arg6: memref<1x2048xf32, #tpu.memory_space<vmem>>) attributes {dimension_semantics = [#tpu.dimension_semantics<parallel>, #tpu.dimension_semantics<parallel>, #tpu.dimension_semantics<arbitrary>], iteration_bounds = array<i64: 1, 2, 1>, scalar_prefetch = 0 : i64, scratch_operands = 1 : i64, tpu.core_type = #tpu.core_type<tc>, window_params = [{transform_indices = @transform_0, window_bounds = array<i64: 1, 4, 2048>}, {transform_indices = @transform_1, window_bounds = array<i64: 1, 1, 2048>}, {transform_indices = @transform_2, window_bounds = array<i64: 1, 1, 8, 128>}]} {
    %c0_i32 = arith.constant 0 : i32
    %0 = arith.cmpi eq, %arg2, %c0_i32 : i32
    %1 = arith.extui %0 : i1 to i32
    %c0_i32_0 = arith.constant 0 : i32
    %2 = arith.cmpi ne, %1, %c0_i32_0 : i32
    scf.if %2 {
      %cst_15 = arith.constant 0.000000e+00 : f32
      %31 = vector.broadcast %cst_15 : f32 to vector<1x2048xf32>
      %c0_16 = arith.constant 0 : index
      %c0_17 = arith.constant 0 : index
      %32 = vector.load %arg6[%c0_16, %c0_17] : memref<1x2048xf32, #tpu.memory_space<vmem>>, vector<1x2048xf32>
      tpu.vector_store %arg6[%c0_16, %c0_17], %31 {strides = array<i32>} : memref<1x2048xf32, #tpu.memory_space<vmem>>, vector<1x2048xf32>,
    } else {
    }
    %c0 = arith.constant 0 : index
    %c0_1 = arith.constant 0 : index
    %c0_2 = arith.constant 0 : index
    %3 = vector.load %arg3[%c0, %c0_1, %c0_2] : memref<1x4x2048xf32, #tpu.memory_space<vmem>>, vector<1x4x2048xf32>
    %4 = vector.shape_cast %3 : vector<1x4x2048xf32> to vector<4x2048xf32>
    %c0_3 = arith.constant 0 : index
    %c0_4 = arith.constant 0 : index
    %c0_5 = arith.constant 0 : index
    %5 = vector.load %arg4[%c0_3, %c0_4, %c0_5] : memref<1x1x2048xi32, #tpu.memory_space<vmem>>, vector<1x1x2048xi32>
    %6 = vector.shape_cast %5 : vector<1x1x2048xi32> to vector<1x2048xi32>
    %7 = tpu.iota {dimensions = array<i32: 0>} : vector<4x1xi32>
    %cst = arith.constant dense<0xFF800000> : vector<2048xf32>
    %8 = vector.multi_reduction <maximumf>, %4, %cst [0] : vector<4x2048xf32> to vector<2048xf32>
    %9 = vector.shape_cast %8 : vector<2048xf32> to vector<1x2048xf32>
    %10 = vector.broadcast %7 : vector<4x1xi32> to vector<4x2048xi32>
    %11 = vector.broadcast %6 : vector<1x2048xi32> to vector<4x2048xi32>
    %12 = arith.cmpi eq, %10, %11 : vector<4x2048xi32>
    %cst_6 = arith.constant 0.000000e+00 : f32
    %13 = vector.broadcast %cst_6 : f32 to vector<4x2048xf32>
    %14 = arith.select %12, %4, %13 : vector<4x2048xi1>, vector<4x2048xf32>
    %cst_7 = arith.constant dense<0.000000e+00> : vector<2048xf32>
    %15 = vector.multi_reduction <add>, %14, %cst_7 [0] : vector<4x2048xf32> to vector<2048xf32>
    %16 = vector.shape_cast %15 : vector<2048xf32> to vector<1x2048xf32>
    %17 = vector.broadcast %9 : vector<1x2048xf32> to vector<4x2048xf32>
    %18 = arith.subf %4, %17 : vector<4x2048xf32>
    %19 = math.exp %18 : vector<4x2048xf32>
    %cst_8 = arith.constant dense<0.000000e+00> : vector<2048xf32>
    %20 = vector.multi_reduction <add>, %19, %cst_8 [0] : vector<4x2048xf32> to vector<2048xf32>
    %21 = vector.shape_cast %20 : vector<2048xf32> to vector<1x2048xf32>
    %22 = math.log %21 : vector<1x2048xf32>
    %23 = arith.addf %9, %22 : vector<1x2048xf32>
    %24 = arith.subf %23, %16 : vector<1x2048xf32>
    %c0_9 = arith.constant 0 : index
    %c0_10 = arith.constant 0 : index
    %25 = vector.load %arg6[%c0_9, %c0_10] : memref<1x2048xf32, #tpu.memory_space<vmem>>, vector<1x2048xf32>
    %26 = arith.addf %25, %24 : vector<1x2048xf32>
    %c0_11 = arith.constant 0 : index
    %c0_12 = arith.constant 0 : index
    %27 = vector.load %arg6[%c0_11, %c0_12] : memref<1x2048xf32, #tpu.memory_space<vmem>>, vector<1x2048xf32>
    tpu.vector_store %arg6[%c0_11, %c0_12], %26 {strides = array<i32>} : memref<1x2048xf32, #tpu.memory_space<vmem>>, vector<1x2048xf32>,
    %c0_i32_13 = arith.constant 0 : i32
    %28 = arith.cmpi eq, %arg2, %c0_i32_13 : i32
    %29 = arith.extui %28 : i1 to i32
    %c0_i32_14 = arith.constant 0 : i32
    %30 = arith.cmpi ne, %29, %c0_i32_14 : i32
    scf.if %30 {
      %c0_15 = arith.constant 0 : index
      %c0_16 = arith.constant 0 : index
      %31 = vector.load %arg6[%c0_15, %c0_16] : memref<1x2048xf32, #tpu.memory_space<vmem>>, vector<1x2048xf32>
      %cst_17 = arith.constant dense<0.000000e+00> : vector<1xf32>
      %32 = vector.multi_reduction <add>, %31, %cst_17 [1] : vector<1x2048xf32> to vector<1xf32>
      %33 = vector.shape_cast %32 : vector<1xf32> to vector<1x1xf32>
      %cst_18 = arith.constant 0.000000e+00 : f32
      %34 = vector.broadcast %cst_18 : f32 to vector<1x1x8x128xf32>
      %35 = vector.shape_cast %33 : vector<1x1xf32> to vector<1x1x1x1xf32>
      %36 = vector.broadcast %35 : vector<1x1x1x1xf32> to vector<1x1x8x128xf32>
      %37 = arith.addf %36, %34 : vector<1x1x8x128xf32>
      %c0_19 = arith.constant 0 : index
      %c0_20 = arith.constant 0 : index
      %c0_21 = arith.constant 0 : index
      %c0_22 = arith.constant 0 : index
      %38 = vector.load %arg5[%c0_19, %c0_20, %c0_21, %c0_22] : memref<1x1x8x128xf32, #tpu.memory_space<vmem>>, vector<1x1x8x128xf32>
      tpu.vector_store %arg5[%c0_19, %c0_20, %c0_21, %c0_22], %37 {strides = array<i32>} : memref<1x1x8x128xf32, #tpu.memory_space<vmem>>, vector<1x1x8x128xf32>,
    } else {
    }
    return
  }
  func.func @transform_0(%arg0: i32, %arg1: i32, %arg2: i32) -> (i32, i32, i32) {
    %c1_i32 = arith.constant 1 : i32
    %0 = arith.muli %arg0, %c1_i32 : i32
    %1 = arith.addi %0, %arg2 : i32
    %c0_i32 = arith.constant 0 : i32
    %2 = arith.minsi %1, %c0_i32 : i32
    %c0_i32_0 = arith.constant 0 : i32
    %c0_i32_1 = arith.constant 0 : i32
    return %arg1, %c0_i32_0, %2 : i32, i32, i32
  }
  func.func @transform_1(%arg0: i32, %arg1: i32, %arg2: i32) -> (i32, i32, i32) {
    %c1_i32 = arith.constant 1 : i32
    %0 = arith.muli %arg0, %c1_i32 : i32
    %1 = arith.addi %0, %arg2 : i32
    %c0_i32 = arith.constant 0 : i32
    %2 = arith.minsi %1, %c0_i32 : i32
    %c0_i32_0 = arith.constant 0 : i32
    %c0_i32_1 = arith.constant 0 : i32
    return %arg1, %c0_i32_0, %2 : i32, i32, i32
  }
  func.func @transform_2(%arg0: i32, %arg1: i32, %arg2: i32) -> (i32, i32, i32, i32) {
    %c0_i32 = arith.constant 0 : i32
    %c0_i32_0 = arith.constant 0 : i32
    %c0_i32_1 = arith.constant 0 : i32
    return %arg0, %arg1, %c0_i32, %c0_i32_0 : i32, i32, i32, i32
  }
}

</mosaic_0001>

<llo_original>
// kernel: tpu_custom_call.1
$region0: #{tpu_custom_call.1}
  #allocation0 [shape = 'u32[]', space=smem, size = 0x4, offset = 0x4, fixed_abs, tag = 'smem constant byte address 0x4 - core index']
  #allocation1 [shape = 'u32[144,128]{1,0:T(1,128)}', space=vmem, size = 0x12000, scoped, tag = 'internal scratch']
  #allocation2 [shape = 'f32[1,2048]{1,0:T(1,128)}', space=vmem, size = 0x2000, scoped, tag = 'scratch operand']
  %s0 = inlined_call_operand.hbm [shape: f32[2,4,2048], index: 0, kind: input, shape index: {}]
  %s1 = inlined_call_operand.hbm [shape: s32[2,1,2048], index: 1, kind: input, shape index: {}]
  %s2 = inlined_call_operand.hbm [shape: f32[1,2,8,128], index: 2, kind: output, shape index: {}]
  %s3 = sld [smem:[#allocation0]]
  $region57: #{tpu_custom_call.1} parent=0
    _
  %s5 = ssub.s32 1, %s3
  %s6 = scalar_select 0, %s5, %s3
  $region1: #{tpu_custom_call.1} parent=0
    #allocation3 [shape = 'u8[65536]{0}', space=vmem, size = 0x10000, scoped, tag = 'input window, operand 0']
    #allocation4 [shape = 's32[2]{0}', space=sflag, size = 0x8, scoped, tag = 'scoped memory for tpu_custom_call.1']
    #allocation5 [shape = 's32[2]{0}', space=sflag, size = 0x8, scoped, tag = 'scoped memory for tpu_custom_call.1']
    #allocation6 [shape = 'u8[16384]{0}', space=vmem, size = 0x4000, scoped, tag = 'input window, operand 1']
    #allocation7 [shape = 's32[2]{0}', space=sflag, size = 0x8, scoped, tag = 'scoped memory for tpu_custom_call.1']
    #allocation8 [shape = 'u8[8192]{0}', space=vmem, size = 0x2000, scoped, tag = 'output window, operand 0']
    %7 = vsyncpa [#allocation4], 0
    %s8 = scalar_lea.sflag [#allocation4], 1
    %9 = vsyncpa %s8, 0
    %10 = vsyncpa [#allocation7], 0
    %s11 = scalar_lea.sflag [#allocation7], 1
    %12 = vsyncpa %s11, 0
    %13 = vsyncpa [#allocation5], 0
    %s14 = scalar_lea.sflag [#allocation5], 1
    %15 = vsyncpa %s14, 0
    loop: start=0, step=1, limit=4
    $region2: #{tpu_custom_call.1} parent=1 // loop_pre_header
      _
    $region3: #{tpu_custom_call.1} parent=1 // loop_header
      %s17 = sphi 0, %s21
      %p18 = scmp.ge.s32.totalorder %s17, 4
      %s24 = sphi 0, %s43
      %s25 = sphi 0, %s39
      %s26 = sphi 0, %s35
      %s27 = sphi 0, %s24
      %s28 = sphi 0, %s25
      %s29 = sphi 0, %s26
      %s30 = sphi 0, %s27
      %s31 = sphi 0, %s28
      %s32 = sphi 0, %s29
      %s54 = sphi 0, %s56
      %s57 = sphi 0, %s54
      %s58 = sphi 0, %s57
      %s74 = sphi 0, %s58
      %s88 = sphi 0, %s90
      %s91 = sphi 0, %s88
      %s92 = sphi 0, %s91
      %s108 = sphi 0, %s92
      %s116 = sphi 0, %s118
      %s119 = sphi 0, %s116
      %s120 = sphi 0, %s119
      %s136 = sphi 0, %s120
    $region4: #{tpu_custom_call.1} parent=1 // loop_header_branch
      %20 = sbr.rel (%p18) target = $region8
    $region5: #{tpu_custom_call.1} parent=1 // loop_body
      %s22 = ssub.s32 %s17, 1
      %s23 = ssub.s32 %s17, 2
      %s33 = sadd.s32 1, %s26
      %p34 = scmp.ge.s32.totalorder %s33, 1
      %s35 = scalar_select %p34, 0, %s33
      %s36 = sadd.s32 1, %s25
      %s37 = scalar_select %p34, %s36, %s25
      %p38 = scmp.ge.s32.totalorder %s37, 2
      %s39 = scalar_select %p38, 0, %s37
      %s40 = sadd.s32 1, %s24
      %s41 = scalar_select %p38, %s40, %s24
      %p42 = scmp.ge.s32.totalorder %s41, 1
      %s43 = scalar_select %p42, 0, %s41
      %s44 = sadd.s32 %s24, %s26
      %p45 = scmp.lt.s32.totalorder %s44, 0
      %s46 = scalar_select %p45, %s44, 0
      %s47 = sadd.s32 %s43, %s35
      %p48 = scmp.lt.s32.totalorder %s47, 0
      %s49 = scalar_select %p48, %s47, 0
      %s50 = ssub.s32 %s25, %s39
      %s51 = ssub.s32 %s46, %s49
      %s52 = sor.u32 %s50, %s51
      %p53 = scmp.eq.s32.totalorder %s52, 0
      %s55 = sadd.s32 %s54, 1
      %s56 = scalar_select %p53, %s54, %s55
      %p59 = pneg %p53
      %p60 = scmp.eq.s32.totalorder %s17, 1
      %p61 = por %p59, %p60
      %p62 = scmp.ne.s32.totalorder %s54, %s57
      %p63 = scmp.eq.s32.totalorder %s17, 0
      %p64 = por %p62, %p63
      %p65 = scmp.ne.s32.totalorder %s54, %s57
      %p66 = scmp.eq.s32.totalorder %s22, 1
      %p67 = por %p65, %p66
      %p68 = scmp.ne.s32.totalorder %s57, %s58
      %p69 = scmp.eq.s32.totalorder %s22, 0
      %p70 = por %p68, %p69
      %p71 = scmp.ne.s32.totalorder %s57, %s58
      %p72 = scmp.eq.s32.totalorder %s23, 1
      %p73 = por %p71, %p72
      %p75 = scmp.ne.s32.totalorder %s58, %s74
      %p76 = scmp.eq.s32.totalorder %s23, 0
      %p77 = por %p75, %p76
      %s78 = sadd.s32 %s24, %s26
      %p79 = scmp.lt.s32.totalorder %s78, 0
      %s80 = scalar_select %p79, %s78, 0
      %s81 = sadd.s32 %s43, %s35
      %p82 = scmp.lt.s32.totalorder %s81, 0
      %s83 = scalar_select %p82, %s81, 0
      %s84 = ssub.s32 %s25, %s39
      %s85 = ssub.s32 %s80, %s83
      %s86 = sor.u32 %s84, %s85
      %p87 = scmp.eq.s32.totalorder %s86, 0
      %s89 = sadd.s32 %s88, 1
      %s90 = scalar_select %p87, %s88, %s89
      %p93 = pneg %p87
      %p94 = scmp.eq.s32.totalorder %s17, 1
      %p95 = por %p93, %p94
      %p96 = scmp.ne.s32.totalorder %s88, %s91
      %p97 = scmp.eq.s32.totalorder %s17, 0
      %p98 = por %p96, %p97
      %p99 = scmp.ne.s32.totalorder %s88, %s91
      %p100 = scmp.eq.s32.totalorder %s22, 1
      %p101 = por %p99, %p100
      %p102 = scmp.ne.s32.totalorder %s91, %s92
      %p103 = scmp.eq.s32.totalorder %s22, 0
      %p104 = por %p102, %p103
      %p105 = scmp.ne.s32.totalorder %s91, %s92
      %p106 = scmp.eq.s32.totalorder %s23, 1
      %p107 = por %p105, %p106
      %p109 = scmp.ne.s32.totalorder %s92, %s108
      %p110 = scmp.eq.s32.totalorder %s23, 0
      %p111 = por %p109, %p110
      %s112 = ssub.s32 %s24, %s43
      %s113 = ssub.s32 %s25, %s39
      %s114 = sor.u32 %s112, %s113
      %p115 = scmp.eq.s32.totalorder %s114, 0
      %s117 = sadd.s32 %s116, 1
      %s118 = scalar_select %p115, %s116, %s117
      %p121 = pneg %p115
      %p122 = scmp.eq.s32.totalorder %s17, 1
      %p123 = por %p121, %p122
      %p124 = scmp.ne.s32.totalorder %s116, %s119
      %p125 = scmp.eq.s32.totalorder %s17, 0
      %p126 = por %p124, %p125
      %p127 = scmp.ne.s32.totalorder %s116, %s119
      %p128 = scmp.eq.s32.totalorder %s22, 1
      %p129 = por %p127, %p128
      %p130 = scmp.ne.s32.totalorder %s119, %s120
      %p131 = scmp.eq.s32.totalorder %s22, 0
      %p132 = por %p130, %p131
      %p133 = scmp.ne.s32.totalorder %s119, %s120
      %p134 = scmp.eq.s32.totalorder %s23, 1
      %p135 = por %p133, %p134
      %p137 = scmp.ne.s32.totalorder %s120, %s136
      %p138 = scmp.eq.s32.totalorder %s23, 0
      %p139 = por %p137, %p138
      %p140 = scmp.le.s32.totalorder 1, %s17
      %p141 = scmp.lt.s32.totalorder %s17, 3
      %p142 = pnand %p140, %p141
      %p143 = pneg %p142
      // Predicated region
      $region9: #{tpu_custom_call.1} parent=5 // pred_check
        _
      $region10: #{tpu_custom_call.1} parent=5 // pred_check_branch
        %145 = sbr.rel (%p142) target = $region12
      $region11: #{tpu_custom_call.1} parent=5 // pred_region
        %s146 = ssub.s32 %s17, 1
      $region12: #{tpu_custom_call.1} parent=5 // pred_fallthru
        _
      %p147 = scmp.lt.s32.totalorder %s17, 2
      // Predicated region
      $region13: #{tpu_custom_call.1} parent=5 // pred_check
        %p148 = pneg %p147
      $region14: #{tpu_custom_call.1} parent=5 // pred_check_branch
        %150 = sbr.rel (%p148) target = $region16
      $region15: #{tpu_custom_call.1} parent=5 // pred_region
        // Predicated region
        $region17: #{tpu_custom_call.1} parent=15 // pred_check
          %p151 = pneg %p64
        $region18: #{tpu_custom_call.1} parent=15 // pred_check_branch
          %153 = sbr.rel (%p151) target = $region20
        $region19: #{tpu_custom_call.1} parent=15 // pred_region
          %s154 = sand.u32 %s54, 1
          %s155 = scalar_lea.sflag [#allocation4], %s154
          %s156 = sand.u32 %s54, 1
          %s157 = smul.addr %s156, 64
          %s158 = scalar_lea.vmem [#allocation3], %s157
          %s159 = sadd.s32 %s24, %s26
          %p160 = scmp.lt.s32.totalorder %s159, 0
          %s161 = scalar_select %p160, %s159, 0
          %s162 = smul.u32 16, %s161
          %s164 = ssub.s32 1024, 1024
          %165 = vsyncadd %s155, %s164
          %s166 = smul.addr %s25, 16
          %s167 = sadd.s32 %s162, %s166
          %s168 = smul.addr %s167, 64
          %s169 = scalar_lea.hbm %s0, %s168
          %s171 = sshll.u32 %s158, 4
          %s172 = int_to_ptr.vmem [resolvable:$true] %s171
          %174 = dma.hbm_to_vmem [thread:$0]  %s169, 1024, %s172, %s155
        $region20: #{tpu_custom_call.1} parent=15 // pred_fallthru
          _
        // Predicated region
        $region21: #{tpu_custom_call.1} parent=15 // pred_check
          %p175 = pneg %p98
        $region22: #{tpu_custom_call.1} parent=15 // pred_check_branch
          %177 = sbr.rel (%p175) target = $region24
        $region23: #{tpu_custom_call.1} parent=15 // pred_region
          %s178 = sand.u32 %s88, 1
          %s179 = scalar_lea.sflag [#allocation7], %s178
          %s180 = sand.u32 %s88, 1
          %s181 = smul.addr %s180, 16
          %s182 = scalar_lea.vmem [#allocation6], %s181
          %s183 = sadd.s32 %s24, %s26
          %p184 = scmp.lt.s32.totalorder %s183, 0
          %s185 = scalar_select %p184, %s183, 0
          %s186 = smul.u32 16, %s185
          %s188 = ssub.s32 256, 256
          %189 = vsyncadd %s179, %s188
          %s190 = smul.addr %s25, 16
          %s191 = sadd.s32 %s186, %s190
          %s192 = smul.addr %s191, 16
          %s193 = scalar_lea.hbm %s1, %s192
          %s195 = sshll.u32 %s182, 4
          %s196 = int_to_ptr.vmem [resolvable:$true] %s195
          %198 = dma.hbm_to_vmem [thread:$0]  %s193, 256, %s196, %s179
        $region24: #{tpu_custom_call.1} parent=15 // pred_fallthru
          _
      $region16: #{tpu_custom_call.1} parent=5 // pred_fallthru
        _
      %p199 = scmp.le.s32.totalorder 1, %s17
      %p200 = scmp.lt.s32.totalorder %s17, 3
      %p201 = pnand %p199, %p200
      %p202 = pneg %p201
      // Predicated region
      $region25: #{tpu_custom_call.1} parent=5 // pred_check
        _
      $region26: #{tpu_custom_call.1} parent=5 // pred_check_branch
        %204 = sbr.rel (%p201) target = $region28
      $region27: #{tpu_custom_call.1} parent=5 // pred_region
        %s205 = ssub.s32 %s17, 1
        %s206 = sand.u32 %s57, 1
        %s207 = scalar_lea.sflag [#allocation4], %s206
        %s208 = sand.u32 %s57, 1
        %s209 = smul.addr %s208, 64
        %s210 = scalar_lea.vmem [#allocation3], %s209
        // Predicated region
        $region29: #{tpu_custom_call.1} parent=27 // pred_check
          %p211 = pneg %p70
        $region30: #{tpu_custom_call.1} parent=27 // pred_check_branch
          %213 = sbr.rel (%p211) target = $region32
        $region31: #{tpu_custom_call.1} parent=27 // pred_region
          %214 = dma.done %s207, 1024
        $region32: #{tpu_custom_call.1} parent=27 // pred_fallthru
          _
        %s215 = sand.u32 %s91, 1
        %s216 = scalar_lea.sflag [#allocation7], %s215
        %s217 = sand.u32 %s91, 1
        %s218 = smul.addr %s217, 16
        %s219 = scalar_lea.vmem [#allocation6], %s218
        // Predicated region
        $region33: #{tpu_custom_call.1} parent=27 // pred_check
          %p220 = pneg %p104
        $region34: #{tpu_custom_call.1} parent=27 // pred_check_branch
          %222 = sbr.rel (%p220) target = $region36
        $region35: #{tpu_custom_call.1} parent=27 // pred_region
          %223 = dma.done %s216, 256
        $region36: #{tpu_custom_call.1} parent=27 // pred_fallthru
          _
        %s224 = sand.u32 %s57, 1
        %s225 = scalar_lea.sflag [#allocation4], %s224
        %s226 = sand.u32 %s57, 1
        %s227 = smul.addr %s226, 64
        %s228 = scalar_lea.vmem [#allocation3], %s227
        %p229 = pneg %p70
        %p230 = pneg %p67
        %s231 = sand.u32 %s91, 1
        %s232 = scalar_lea.sflag [#allocation7], %s231
        %s233 = sand.u32 %s91, 1
        %s234 = smul.addr %s233, 16
        %s235 = scalar_lea.vmem [#allocation6], %s234
        %p236 = pneg %p104
        %p237 = pneg %p101
        %p238 = pneg %p132
        %p239 = pneg %p129
        %s240 = sand.u32 %s119, 1
        %s241 = scalar_lea.sflag [#allocation5], %s240
        %s242 = sand.u32 %s119, 1
        %s243 = smul.addr %s242, 8
        %s244 = scalar_lea.vmem [#allocation8], %s243
        %s245 = sadd.s32 %s27, %s29
        %p246 = scmp.lt.s32.totalorder %s245, 0
        %s247 = scalar_select %p246, %s245, 0
        %s248 = smul.u32 16, %s247
        %s249 = sadd.s32 %s27, %s29
        %p250 = scmp.lt.s32.totalorder %s249, 0
        %s251 = scalar_select %p250, %s249, 0
        %s252 = smul.u32 16, %s251
        %p253 = scmp.eq.s32.totalorder %s29, 0
        // Predicated region
        $region37: #{tpu_custom_call.1} parent=27 // pred_check
          %p254 = pneg %p253
        $region38: #{tpu_custom_call.1} parent=27 // pred_check_branch
          %256 = sbr.rel (%p254) target = $region40
        $region39: #{tpu_custom_call.1} parent=27 // pred_region
          %257 = vst [vmem:[#allocation2] sm:$0xff] 0.0
          %258 = vst [vmem:[#allocation2 + $0x8] sm:$0xff] 0.0
        $region40: #{tpu_custom_call.1} parent=27 // pred_fallthru
          _
        %v259 = vld [vmem:[%s210] sm:$0xff]
        %v260 = vld [vmem:[%s210 + $0x8] sm:$0xff]
        %v261 = vld [vmem:[%s210 + $0x10] sm:$0xff]
        %v262 = vld [vmem:[%s210 + $0x18] sm:$0xff]
        %v263 = vld [vmem:[%s210 + $0x20] sm:$0xff]
        %v264 = vld [vmem:[%s210 + $0x28] sm:$0xff]
        %v265 = vld [vmem:[%s210 + $0x30] sm:$0xff]
        %v266 = vld [vmem:[%s210 + $0x38] sm:$0xff]
        %v267 = vld [vmem:[%s219] sm:$0xff]
        %v268 = vld [vmem:[%s219 + $0x8] sm:$0xff]
        %v269 = vlaneseq
        %v270 = vshrl.u32 %v269, 7
        %v279 = vcombine.high %v259, %v259
        %v280 = vcombine.high %v260, %v260
        %v281 = vcombine.high %v261, %v261
        %v282 = vcombine.high %v262, %v262
        %v283 = vcombine.high %v263, %v263
        %v284 = vcombine.high %v264, %v264
        %v285 = vcombine.high %v265, %v265
        %v286 = vcombine.high %v266, %v266
        %vm295 = vcmask 1043456
        %v296 = vsel %vm295, %v259, -inf
        %v297 = vrot.slane %v296, 4
        %v298 = vmax.f32 %v296, %v297
        %v299 = vrot.slane %v298, 2
        %v300 = vmax.f32 %v298, %v299
        %v301 = vrot.slane %v300, 1
        %v302 = vmax.f32 %v300, %v301
        %v303 = vsel %vm295, %v279, -inf
        %v304 = vrot.slane %v303, 4
        %v305 = vmax.f32 %v303, %v304
        %v306 = vrot.slane %v305, 2
        %v307 = vmax.f32 %v305, %v306
        %v308 = vrot.slane %v307, 1
        %v309 = vmax.f32 %v307, %v308
        %v310 = vsel %vm295, %v260, -inf
        %v311 = vrot.slane %v310, 4
        %v312 = vmax.f32 %v310, %v311
        %v313 = vrot.slane %v312, 2
        %v314 = vmax.f32 %v312, %v313
        %v315 = vrot.slane %v314, 1
        %v316 = vmax.f32 %v314, %v315
        %v317 = vsel %vm295, %v280, -inf
        %v318 = vrot.slane %v317, 4
        %v319 = vmax.f32 %v317, %v318
        %v320 = vrot.slane %v319, 2
        %v321 = vmax.f32 %v319, %v320
        %v322 = vrot.slane %v321, 1
        %v323 = vmax.f32 %v321, %v322
        %v324 = vsel %vm295, %v261, -inf
        %v325 = vrot.slane %v324, 4
        %v326 = vmax.f32 %v324, %v325
        %v327 = vrot.slane %v326, 2
        %v328 = vmax.f32 %v326, %v327
        %v329 = vrot.slane %v328, 1
        %v330 = vmax.f32 %v328, %v329
        %v331 = vsel %vm295, %v281, -inf
        %v332 = vrot.slane %v331, 4
        %v333 = vmax.f32 %v331, %v332
        %v334 = vrot.slane %v333, 2
        %v335 = vmax.f32 %v333, %v334
        %v336 = vrot.slane %v335, 1
        %v337 = vmax.f32 %v335, %v336
        %v338 = vsel %vm295, %v262, -inf
        %v339 = vrot.slane %v338, 4
        %v340 = vmax.f32 %v338, %v339
        %v341 = vrot.slane %v340, 2
        %v342 = vmax.f32 %v340, %v341
        %v343 = vrot.slane %v342, 1
        %v344 = vmax.f32 %v342, %v343
        %v345 = vsel %vm295, %v282, -inf
        %v346 = vrot.slane %v345, 4
        %v347 = vmax.f32 %v345, %v346
        %v348 = vrot.slane %v347, 2
        %v349 = vmax.f32 %v347, %v348
        %v350 = vrot.slane %v349, 1
        %v351 = vmax.f32 %v349, %v350
        %v352 = vsel %vm295, %v263, -inf
        %v353 = vrot.slane %v352, 4
        %v354 = vmax.f32 %v352, %v353
        %v355 = vrot.slane %v354, 2
        %v356 = vmax.f32 %v354, %v355
        %v357 = vrot.slane %v356, 1
        %v358 = vmax.f32 %v356, %v357
        %v359 = vsel %vm295, %v283, -inf
        %v360 = vrot.slane %v359, 4
        %v361 = vmax.f32 %v359, %v360
        %v362 = vrot.slane %v361, 2
        %v363 = vmax.f32 %v361, %v362
        %v364 = vrot.slane %v363, 1
        %v365 = vmax.f32 %v363, %v364
        %v366 = vsel %vm295, %v264, -inf
        %v367 = vrot.slane %v366, 4
        %v368 = vmax.f32 %v366, %v367
        %v369 = vrot.slane %v368, 2
        %v370 = vmax.f32 %v368, %v369
        %v371 = vrot.slane %v370, 1
        %v372 = vmax.f32 %v370, %v371
        %v373 = vsel %vm295, %v284, -inf
        %v374 = vrot.slane %v373, 4
        %v375 = vmax.f32 %v373, %v374
        %v376 = vrot.slane %v375, 2
        %v377 = vmax.f32 %v375, %v376
        %v378 = vrot.slane %v377, 1
        %v379 = vmax.f32 %v377, %v378
        %v380 = vsel %vm295, %v265, -inf
        %v381 = vrot.slane %v380, 4
        %v382 = vmax.f32 %v380, %v381
        %v383 = vrot.slane %v382, 2
        %v384 = vmax.f32 %v382, %v383
        %v385 = vrot.slane %v384, 1
        %v386 = vmax.f32 %v384, %v385
        %v387 = vsel %vm295, %v285, -inf
        %v388 = vrot.slane %v387, 4
        %v389 = vmax.f32 %v387, %v388
        %v390 = vrot.slane %v389, 2
        %v391 = vmax.f32 %v389, %v390
        %v392 = vrot.slane %v391, 1
        %v393 = vmax.f32 %v391, %v392
        %v394 = vsel %vm295, %v266, -inf
        %v395 = vrot.slane %v394, 4
        %v396 = vmax.f32 %v394, %v395
        %v397 = vrot.slane %v396, 2
        %v398 = vmax.f32 %v396, %v397
        %v399 = vrot.slane %v398, 1
        %v400 = vmax.f32 %v398, %v399
        %v401 = vsel %vm295, %v286, -inf
        %v402 = vrot.slane %v401, 4
        %v403 = vmax.f32 %v401, %v402
        %v404 = vrot.slane %v403, 2
        %v405 = vmax.f32 %v403, %v404
        %v406 = vrot.slane %v405, 1
        %v407 = vmax.f32 %v405, %v406
        %v408 = vlaneseq
        %v409 = vshrl.u32 %v408, 7
        %v410 = vsub.s32 0, %v409
        %v411 = vrot.slane %v267, %v410
        %v412 = vlaneseq
        %v413 = vshrl.u32 %v412, 7
        %v414 = vsub.s32 1, %v413
        %v415 = vrot.slane %v267, %v414
        %v416 = vlaneseq
        %v417 = vshrl.u32 %v416, 7
        %v418 = vsub.s32 2, %v417
        %v419 = vrot.slane %v267, %v418
        %v420 = vlaneseq
        %v421 = vshrl.u32 %v420, 7
        %v422 = vsub.s32 3, %v421
        %v423 = vrot.slane %v267, %v422
        %v424 = vlaneseq
        %v425 = vshrl.u32 %v424, 7
        %v426 = vsub.s32 4, %v425
        %v427 = vrot.slane %v267, %v426
        %v428 = vlaneseq
        %v429 = vshrl.u32 %v428, 7
        %v430 = vsub.s32 5, %v429
        %v431 = vrot.slane %v267, %v430
        %v432 = vlaneseq
        %v433 = vshrl.u32 %v432, 7
        %v434 = vsub.s32 6, %v433
        %v435 = vrot.slane %v267, %v434
        %v436 = vlaneseq
        %v437 = vshrl.u32 %v436, 7
        %v438 = vsub.s32 7, %v437
        %v439 = vrot.slane %v267, %v438
        %v440 = vlaneseq
        %v441 = vshrl.u32 %v440, 7
        %v442 = vsub.s32 0, %v441
        %v443 = vrot.slane %v268, %v442
        %v444 = vlaneseq
        %v445 = vshrl.u32 %v444, 7
        %v446 = vsub.s32 1, %v445
        %v447 = vrot.slane %v268, %v446
        %v448 = vlaneseq
        %v449 = vshrl.u32 %v448, 7
        %v450 = vsub.s32 2, %v449
        %v451 = vrot.slane %v268, %v450
        %v452 = vlaneseq
        %v453 = vshrl.u32 %v452, 7
        %v454 = vsub.s32 3, %v453
        %v455 = vrot.slane %v268, %v454
        %v456 = vlaneseq
        %v457 = vshrl.u32 %v456, 7
        %v458 = vsub.s32 4, %v457
        %v459 = vrot.slane %v268, %v458
        %v460 = vlaneseq
        %v461 = vshrl.u32 %v460, 7
        %v462 = vsub.s32 5, %v461
        %v463 = vrot.slane %v268, %v462
        %v464 = vlaneseq
        %v465 = vshrl.u32 %v464, 7
        %v466 = vsub.s32 6, %v465
        %v467 = vrot.slane %v268, %v466
        %v468 = vlaneseq
        %v469 = vshrl.u32 %v468, 7
        %v470 = vsub.s32 7, %v469
        %v471 = vrot.slane %v268, %v470
        %vm472 = vcmp.eq.s32.totalorder %v270, %v411
        %vm473 = vcmp.eq.s32.totalorder %v270, %v415
        %vm474 = vcmp.eq.s32.totalorder %v270, %v419
        %vm475 = vcmp.eq.s32.totalorder %v270, %v423
        %vm476 = vcmp.eq.s32.totalorder %v270, %v427
        %vm477 = vcmp.eq.s32.totalorder %v270, %v431
        %vm478 = vcmp.eq.s32.totalorder %v270, %v435
        %vm479 = vcmp.eq.s32.totalorder %v270, %v439
        %vm480 = vcmp.eq.s32.totalorder %v270, %v443
        %vm481 = vcmp.eq.s32.totalorder %v270, %v447
        %vm482 = vcmp.eq.s32.totalorder %v270, %v451
        %vm483 = vcmp.eq.s32.totalorder %v270, %v455
        %vm484 = vcmp.eq.s32.totalorder %v270, %v459
        %vm485 = vcmp.eq.s32.totalorder %v270, %v463
        %vm486 = vcmp.eq.s32.totalorder %v270, %v467
        %vm487 = vcmp.eq.s32.totalorder %v270, %v471
        %v488 = vsel %vm472, %v259, 0.0
        %v489 = vsel %vm473, %v279, 0.0
        %v490 = vsel %vm474, %v260, 0.0
        %v491 = vsel %vm475, %v280, 0.0
        %v492 = vsel %vm476, %v261, 0.0
        %v493 = vsel %vm477, %v281, 0.0
        %v494 = vsel %vm478, %v262, 0.0
        %v495 = vsel %vm479, %v282, 0.0
        %v496 = vsel %vm480, %v263, 0.0
        %v497 = vsel %vm481, %v283, 0.0
        %v498 = vsel %vm482, %v264, 0.0
        %v499 = vsel %vm483, %v284, 0.0
        %v500 = vsel %vm484, %v265, 0.0
        %v501 = vsel %vm485, %v285, 0.0
        %v502 = vsel %vm486, %v266, 0.0
        %v503 = vsel %vm487, %v286, 0.0
        %v504 = vsel %vm295, %v488, 0.0
        %v505 = vrot.slane %v504, 4
        %v506 = vadd.f32 %v504, %v505
        %v507 = vrot.slane %v506, 2
        %v508 = vadd.f32 %v506, %v507
        %v509 = vrot.slane %v508, 1
        %v510 = vadd.f32 %v508, %v509
        %v511 = vsel %vm295, %v489, 0.0
        %v512 = vrot.slane %v511, 4
        %v513 = vadd.f32 %v511, %v512
        %v514 = vrot.slane %v513, 2
        %v515 = vadd.f32 %v513, %v514
        %v516 = vrot.slane %v515, 1
        %v517 = vadd.f32 %v515, %v516
        %v518 = vsel %vm295, %v490, 0.0
        %v519 = vrot.slane %v518, 4
        %v520 = vadd.f32 %v518, %v519
        %v521 = vrot.slane %v520, 2
        %v522 = vadd.f32 %v520, %v521
        %v523 = vrot.slane %v522, 1
        %v524 = vadd.f32 %v522, %v523
        %v525 = vsel %vm295, %v491, 0.0
        %v526 = vrot.slane %v525, 4
        %v527 = vadd.f32 %v525, %v526
        %v528 = vrot.slane %v527, 2
        %v529 = vadd.f32 %v527, %v528
        %v530 = vrot.slane %v529, 1
        %v531 = vadd.f32 %v529, %v530
        %v532 = vsel %vm295, %v492, 0.0
        %v533 = vrot.slane %v532, 4
        %v534 = vadd.f32 %v532, %v533
        %v535 = vrot.slane %v534, 2
        %v536 = vadd.f32 %v534, %v535
        %v537 = vrot.slane %v536, 1
        %v538 = vadd.f32 %v536, %v537
        %v539 = vsel %vm295, %v493, 0.0
        %v540 = vrot.slane %v539, 4
        %v541 = vadd.f32 %v539, %v540
        %v542 = vrot.slane %v541, 2
        %v543 = vadd.f32 %v541, %v542
        %v544 = vrot.slane %v543, 1
        %v545 = vadd.f32 %v543, %v544
        %v546 = vsel %vm295, %v494, 0.0
        %v547 = vrot.slane %v546, 4
        %v548 = vadd.f32 %v546, %v547
        %v549 = vrot.slane %v548, 2
        %v550 = vadd.f32 %v548, %v549
        %v551 = vrot.slane %v550, 1
        %v552 = vadd.f32 %v550, %v551
        %v553 = vsel %vm295, %v495, 0.0
        %v554 = vrot.slane %v553, 4
        %v555 = vadd.f32 %v553, %v554
        %v556 = vrot.slane %v555, 2
        %v557 = vadd.f32 %v555, %v556
        %v558 = vrot.slane %v557, 1
        %v559 = vadd.f32 %v557, %v558
        %v560 = vsel %vm295, %v496, 0.0
        %v561 = vrot.slane %v560, 4
        %v562 = vadd.f32 %v560, %v561
        %v563 = vrot.slane %v562, 2
        %v564 = vadd.f32 %v562, %v563
        %v565 = vrot.slane %v564, 1
        %v566 = vadd.f32 %v564, %v565
        %v567 = vsel %vm295, %v497, 0.0
        %v568 = vrot.slane %v567, 4
        %v569 = vadd.f32 %v567, %v568
        %v570 = vrot.slane %v569, 2
        %v571 = vadd.f32 %v569, %v570
        %v572 = vrot.slane %v571, 1
        %v573 = vadd.f32 %v571, %v572
        %v574 = vsel %vm295, %v498, 0.0
        %v575 = vrot.slane %v574, 4
        %v576 = vadd.f32 %v574, %v575
        %v577 = vrot.slane %v576, 2
        %v578 = vadd.f32 %v576, %v577
        %v579 = vrot.slane %v578, 1
        %v580 = vadd.f32 %v578, %v579
        %v581 = vsel %vm295, %v499, 0.0
        %v582 = vrot.slane %v581, 4
        %v583 = vadd.f32 %v581, %v582
        %v584 = vrot.slane %v583, 2
        %v585 = vadd.f32 %v583, %v584
        %v586 = vrot.slane %v585, 1
        %v587 = vadd.f32 %v585, %v586
        %v588 = vsel %vm295, %v500, 0.0
        %v589 = vrot.slane %v588, 4
        %v590 = vadd.f32 %v588, %v589
        %v591 = vrot.slane %v590, 2
        %v592 = vadd.f32 %v590, %v591
        %v593 = vrot.slane %v592, 1
        %v594 = vadd.f32 %v592, %v593
        %v595 = vsel %vm295, %v501, 0.0
        %v596 = vrot.slane %v595, 4
        %v597 = vadd.f32 %v595, %v596
        %v598 = vrot.slane %v597, 2
        %v599 = vadd.f32 %v597, %v598
        %v600 = vrot.slane %v599, 1
        %v601 = vadd.f32 %v599, %v600
        %v602 = vsel %vm295, %v502, 0.0
        %v603 = vrot.slane %v602, 4
        %v604 = vadd.f32 %v602, %v603
        %v605 = vrot.slane %v604, 2
        %v606 = vadd.f32 %v604, %v605
        %v607 = vrot.slane %v606, 1
        %v608 = vadd.f32 %v606, %v607
        %v609 = vsel %vm295, %v503, 0.0
        %v610 = vrot.slane %v609, 4
        %v611 = vadd.f32 %v609, %v610
        %v612 = vrot.slane %v611, 2
        %v613 = vadd.f32 %v611, %v612
        %v614 = vrot.slane %v613, 1
        %v615 = vadd.f32 %v613, %v614
        %v632 = vcombine.low %v302, %v309
        %v633 = vcombine.low %v316, %v323
        %v634 = vcombine.low %v330, %v337
        %v635 = vcombine.low %v344, %v351
        %v636 = vcombine.low %v358, %v365
        %v637 = vcombine.low %v372, %v379
        %v638 = vcombine.low %v386, %v393
        %v639 = vcombine.low %v400, %v407
        %v648 = vsub.f32 %v259, %v632
        %v649 = vsub.f32 %v260, %v633
        %v650 = vsub.f32 %v261, %v634
        %v651 = vsub.f32 %v262, %v635
        %v652 = vsub.f32 %v263, %v636
        %v653 = vsub.f32 %v264, %v637
        %v654 = vsub.f32 %v265, %v638
        %v655 = vsub.f32 %v266, %v639
        %v656 = vmul.f32 %v648, 1.442695
        %v657 = vpow.pop %v656
        %v658 = vmul.f32 %v649, 1.442695
        %v659 = vpow.pop %v658
        %v660 = vmul.f32 %v650, 1.442695
        %v661 = vpow.pop %v660
        %v662 = vmul.f32 %v651, 1.442695
        %v663 = vpow.pop %v662
        %v664 = vmul.f32 %v652, 1.442695
        %v665 = vpow.pop %v664
        %v666 = vmul.f32 %v653, 1.442695
        %v667 = vpow.pop %v666
        %v668 = vmul.f32 %v654, 1.442695
        %v669 = vpow.pop %v668
        %v670 = vmul.f32 %v655, 1.442695
        %v671 = vpow.pop %v670
        %v680 = vcombine.high %v657, %v657
        %v681 = vcombine.high %v659, %v659
        %v682 = vcombine.high %v661, %v661
        %v683 = vcombine.high %v663, %v663
        %v684 = vcombine.high %v665, %v665
        %v685 = vcombine.high %v667, %v667
        %v686 = vcombine.high %v669, %v669
        %v687 = vcombine.high %v671, %v671
        %v696 = vsel %vm295, %v657, 0.0
        %v697 = vrot.slane %v696, 4
        %v698 = vadd.f32 %v696, %v697
        %v699 = vrot.slane %v698, 2
        %v700 = vadd.f32 %v698, %v699
        %v701 = vrot.slane %v700, 1
        %v702 = vadd.f32 %v700, %v701
        %v703 = vsel %vm295, %v680, 0.0
        %v704 = vrot.slane %v703, 4
        %v705 = vadd.f32 %v703, %v704
        %v706 = vrot.slane %v705, 2
        %v707 = vadd.f32 %v705, %v706
        %v708 = vrot.slane %v707, 1
        %v709 = vadd.f32 %v707, %v708
        %v710 = vsel %vm295, %v659, 0.0
        %v711 = vrot.slane %v710, 4
        %v712 = vadd.f32 %v710, %v711
        %v713 = vrot.slane %v712, 2
        %v714 = vadd.f32 %v712, %v713
        %v715 = vrot.slane %v714, 1
        %v716 = vadd.f32 %v714, %v715
        %v717 = vsel %vm295, %v681, 0.0
        %v718 = vrot.slane %v717, 4
        %v719 = vadd.f32 %v717, %v718
        %v720 = vrot.slane %v719, 2
        %v721 = vadd.f32 %v719, %v720
        %v722 = vrot.slane %v721, 1
        %v723 = vadd.f32 %v721, %v722
        %v724 = vsel %vm295, %v661, 0.0
        %v725 = vrot.slane %v724, 4
        %v726 = vadd.f32 %v724, %v725
        %v727 = vrot.slane %v726, 2
        %v728 = vadd.f32 %v726, %v727
        %v729 = vrot.slane %v728, 1
        %v730 = vadd.f32 %v728, %v729
        %v731 = vsel %vm295, %v682, 0.0
        %v732 = vrot.slane %v731, 4
        %v733 = vadd.f32 %v731, %v732
        %v734 = vrot.slane %v733, 2
        %v735 = vadd.f32 %v733, %v734
        %v736 = vrot.slane %v735, 1
        %v737 = vadd.f32 %v735, %v736
        %v738 = vsel %vm295, %v663, 0.0
        %v739 = vrot.slane %v738, 4
        %v740 = vadd.f32 %v738, %v739
        %v741 = vrot.slane %v740, 2
        %v742 = vadd.f32 %v740, %v741
        %v743 = vrot.slane %v742, 1
        %v744 = vadd.f32 %v742, %v743
        %v745 = vsel %vm295, %v683, 0.0
        %v746 = vrot.slane %v745, 4
        %v747 = vadd.f32 %v745, %v746
        %v748 = vrot.slane %v747, 2
        %v749 = vadd.f32 %v747, %v748
        %v750 = vrot.slane %v749, 1
        %v751 = vadd.f32 %v749, %v750
        %v752 = vsel %vm295, %v665, 0.0
        %v753 = vrot.slane %v752, 4
        %v754 = vadd.f32 %v752, %v753
        %v755 = vrot.slane %v754, 2
        %v756 = vadd.f32 %v754, %v755
        %v757 = vrot.slane %v756, 1
        %v758 = vadd.f32 %v756, %v757
        %v759 = vsel %vm295, %v684, 0.0
        %v760 = vrot.slane %v759, 4
        %v761 = vadd.f32 %v759, %v760
        %v762 = vrot.slane %v761, 2
        %v763 = vadd.f32 %v761, %v762
        %v764 = vrot.slane %v763, 1
        %v765 = vadd.f32 %v763, %v764
        %v766 = vsel %vm295, %v667, 0.0
        %v767 = vrot.slane %v766, 4
        %v768 = vadd.f32 %v766, %v767
        %v769 = vrot.slane %v768, 2
        %v770 = vadd.f32 %v768, %v769
        %v771 = vrot.slane %v770, 1
        %v772 = vadd.f32 %v770, %v771
        %v773 = vsel %vm295, %v685, 0.0
        %v774 = vrot.slane %v773, 4
        %v775 = vadd.f32 %v773, %v774
        %v776 = vrot.slane %v775, 2
        %v777 = vadd.f32 %v775, %v776
        %v778 = vrot.slane %v777, 1
        %v779 = vadd.f32 %v777, %v778
        %v780 = vsel %vm295, %v669, 0.0
        %v781 = vrot.slane %v780, 4
        %v782 = vadd.f32 %v780, %v781
        %v783 = vrot.slane %v782, 2
        %v784 = vadd.f32 %v782, %v783
        %v785 = vrot.slane %v784, 1
        %v786 = vadd.f32 %v784, %v785
        %v787 = vsel %vm295, %v686, 0.0
        %v788 = vrot.slane %v787, 4
        %v789 = vadd.f32 %v787, %v788
        %v790 = vrot.slane %v789, 2
        %v791 = vadd.f32 %v789, %v790
        %v792 = vrot.slane %v791, 1
        %v793 = vadd.f32 %v791, %v792
        %v794 = vsel %vm295, %v671, 0.0
        %v795 = vrot.slane %v794, 4
        %v796 = vadd.f32 %v794, %v795
        %v797 = vrot.slane %v796, 2
        %v798 = vadd.f32 %v796, %v797
        %v799 = vrot.slane %v798, 1
        %v800 = vadd.f32 %v798, %v799
        %v801 = vsel %vm295, %v687, 0.0
        %v802 = vrot.slane %v801, 4
        %v803 = vadd.f32 %v801, %v802
        %v804 = vrot.slane %v803, 2
        %v805 = vadd.f32 %v803, %v804
        %v806 = vrot.slane %v805, 1
        %v807 = vadd.f32 %v805, %v806
        %v808 = vlog2.pop %v702
        %v809 = vmul.f32 %v808, 0.6931472
        %v810 = vlog2.pop %v709
        %v811 = vmul.f32 %v810, 0.6931472
        %v812 = vlog2.pop %v716
        %v813 = vmul.f32 %v812, 0.6931472
        %v814 = vlog2.pop %v723
        %v815 = vmul.f32 %v814, 0.6931472
        %v816 = vlog2.pop %v730
        %v817 = vmul.f32 %v816, 0.6931472
        %v818 = vlog2.pop %v737
        %v819 = vmul.f32 %v818, 0.6931472
        %v820 = vlog2.pop %v744
        %v821 = vmul.f32 %v820, 0.6931472
        %v822 = vlog2.pop %v751
        %v823 = vmul.f32 %v822, 0.6931472
        %v824 = vlog2.pop %v758
        %v825 = vmul.f32 %v824, 0.6931472
        %v826 = vlog2.pop %v765
        %v827 = vmul.f32 %v826, 0.6931472
        %v828 = vlog2.pop %v772
        %v829 = vmul.f32 %v828, 0.6931472
        %v830 = vlog2.pop %v779
        %v831 = vmul.f32 %v830, 0.6931472
        %v832 = vlog2.pop %v786
        %v833 = vmul.f32 %v832, 0.6931472
        %v834 = vlog2.pop %v793
        %v835 = vmul.f32 %v834, 0.6931472
        %v836 = vlog2.pop %v800
        %v837 = vmul.f32 %v836, 0.6931472
        %v838 = vlog2.pop %v807
        %v839 = vmul.f32 %v838, 0.6931472
        %v840 = vadd.f32 %v302, %v809
        %v841 = vadd.f32 %v309, %v811
        %v842 = vadd.f32 %v316, %v813
        %v843 = vadd.f32 %v323, %v815
        %v844 = vadd.f32 %v330, %v817
        %v845 = vadd.f32 %v337, %v819
        %v846 = vadd.f32 %v344, %v821
        %v847 = vadd.f32 %v351, %v823
        %v848 = vadd.f32 %v358, %v825
        %v849 = vadd.f32 %v365, %v827
        %v850 = vadd.f32 %v372, %v829
        %v851 = vadd.f32 %v379, %v831
        %v852 = vadd.f32 %v386, %v833
        %v853 = vadd.f32 %v393, %v835
        %v854 = vadd.f32 %v400, %v837
        %v855 = vadd.f32 %v407, %v839
        %v856 = vsub.f32 %v840, %v510
        %v857 = vsub.f32 %v841, %v517
        %v858 = vsub.f32 %v842, %v524
        %v859 = vsub.f32 %v843, %v531
        %v860 = vsub.f32 %v844, %v538
        %v861 = vsub.f32 %v845, %v545
        %v862 = vsub.f32 %v846, %v552
        %v863 = vsub.f32 %v847, %v559
        %v864 = vsub.f32 %v848, %v566
        %v865 = vsub.f32 %v849, %v573
        %v866 = vsub.f32 %v850, %v580
        %v867 = vsub.f32 %v851, %v587
        %v868 = vsub.f32 %v852, %v594
        %v869 = vsub.f32 %v853, %v601
        %v870 = vsub.f32 %v854, %v608
        %v871 = vsub.f32 %v855, %v615
        %v872 = vld [vmem:[#allocation2] sm:$0xff]
        %v873 = vld [vmem:[#allocation2 + $0x8] sm:$0xff]
        %v890 = vcombine.low %v856, %v857
        %v891 = vcombine.low %v858, %v859
        %v892 = vcombine.low %v860, %v861
        %v893 = vcombine.low %v862, %v863
        %v895 = vunpack.c.l.s4 1966171168
        %v896 = vunpack.c.0.s8 %v895
        %v897 = vlaneseq
        %v898 = vshrl.u32 %v897, 7
        %v899 = vsub.s32 %v896, %v898
        %v900 = vrot.slane %v890, %v899
        %v902 = vunpack.c.l.s4 1966171168
        %v903 = vunpack.c.0.s8 %v902
        %v904 = vlaneseq
        %v905 = vshrl.u32 %v904, 7
        %v906 = vsub.s32 %v903, %v905
        %v907 = vrot.slane %v891, %v906
        %v909 = vunpack.c.l.s4 1966171168
        %v910 = vunpack.c.0.s8 %v909
        %v911 = vlaneseq
        %v912 = vshrl.u32 %v911, 7
        %v913 = vsub.s32 %v910, %v912
        %v914 = vrot.slane %v892, %v913
        %v916 = vunpack.c.l.s4 1966171168
        %v917 = vunpack.c.0.s8 %v916
        %v918 = vlaneseq
        %v919 = vshrl.u32 %v918, 7
        %v920 = vsub.s32 %v917, %v919
        %v921 = vrot.slane %v893, %v920
        %v922 = vcombine.low %v900, %v907
        %v923 = vcombine.low %v914, %v921
        %v925 = vunpack.c.l.s4 1966171168
        %v926 = vunpack.c.0.s8 %v925
        %v927 = vlaneseq
        %v928 = vshrl.u32 %v927, 7
        %v929 = vsub.s32 %v926, %v928
        %v930 = vrot.slane %v922, %v929
        %v932 = vunpack.c.l.s4 1966171168
        %v933 = vunpack.c.0.s8 %v932
        %v934 = vlaneseq
        %v935 = vshrl.u32 %v934, 7
        %v936 = vsub.s32 %v933, %v935
        %v937 = vrot.slane %v923, %v936
        %v938 = vcombine.low %v930, %v937
        %v939 = vcombine.low %v864, %v865
        %v940 = vcombine.low %v866, %v867
        %v941 = vcombine.low %v868, %v869
        %v942 = vcombine.low %v870, %v871
        %v944 = vunpack.c.l.s4 1966171168
        %v945 = vunpack.c.0.s8 %v944
        %v946 = vlaneseq
        %v947 = vshrl.u32 %v946, 7
        %v948 = vsub.s32 %v945, %v947
        %v949 = vrot.slane %v939, %v948
        %v951 = vunpack.c.l.s4 1966171168
        %v952 = vunpack.c.0.s8 %v951
        %v953 = vlaneseq
        %v954 = vshrl.u32 %v953, 7
        %v955 = vsub.s32 %v952, %v954
        %v956 = vrot.slane %v940, %v955
        %v958 = vunpack.c.l.s4 1966171168
        %v959 = vunpack.c.0.s8 %v958
        %v960 = vlaneseq
        %v961 = vshrl.u32 %v960, 7
        %v962 = vsub.s32 %v959, %v961
        %v963 = vrot.slane %v941, %v962
        %v965 = vunpack.c.l.s4 1966171168
        %v966 = vunpack.c.0.s8 %v965
        %v967 = vlaneseq
        %v968 = vshrl.u32 %v967, 7
        %v969 = vsub.s32 %v966, %v968
        %v970 = vrot.slane %v942, %v969
        %v971 = vcombine.low %v949, %v956
        %v972 = vcombine.low %v963, %v970
        %v974 = vunpack.c.l.s4 1966171168
        %v975 = vunpack.c.0.s8 %v974
        %v976 = vlaneseq
        %v977 = vshrl.u32 %v976, 7
        %v978 = vsub.s32 %v975, %v977
        %v979 = vrot.slane %v971, %v978
        %v981 = vunpack.c.l.s4 1966171168
        %v982 = vunpack.c.0.s8 %v981
        %v983 = vlaneseq
        %v984 = vshrl.u32 %v983, 7
        %v985 = vsub.s32 %v982, %v984
        %v986 = vrot.slane %v972, %v985
        %v987 = vcombine.low %v979, %v986
        %v990 = vadd.f32 %v872, %v938
        %v991 = vadd.f32 %v873, %v987
        %992 = vst [vmem:[#allocation2] sm:$0xff] %v990
        %993 = vst [vmem:[#allocation2 + $0x8] sm:$0xff] %v991
        // Predicated region
        $region41: #{tpu_custom_call.1} parent=27 // pred_check
          %p994 = pneg %p253
        $region42: #{tpu_custom_call.1} parent=27 // pred_check_branch
          %996 = sbr.rel (%p994) target = $region44
        $region43: #{tpu_custom_call.1} parent=27 // pred_region
          %v997 = vld [vmem:[#allocation2] sm:$0xff]
          %v998 = vld [vmem:[#allocation2 + $0x8] sm:$0xff]
          %v1001 = vlaneseq
          %v1002 = vshrl.u32 %v1001, 7
          %v1003 = vsub.s32 0, %v1002
          %v1004 = vrot.slane %v997, %v1003
          %v1005 = vlaneseq
          %v1006 = vshrl.u32 %v1005, 7
          %v1007 = vsub.s32 1, %v1006
          %v1008 = vrot.slane %v997, %v1007
          %v1009 = vlaneseq
          %v1010 = vshrl.u32 %v1009, 7
          %v1011 = vsub.s32 2, %v1010
          %v1012 = vrot.slane %v997, %v1011
          %v1013 = vlaneseq
          %v1014 = vshrl.u32 %v1013, 7
          %v1015 = vsub.s32 3, %v1014
          %v1016 = vrot.slane %v997, %v1015
          %v1017 = vlaneseq
          %v1018 = vshrl.u32 %v1017, 7
          %v1019 = vsub.s32 4, %v1018
          %v1020 = vrot.slane %v997, %v1019
          %v1021 = vlaneseq
          %v1022 = vshrl.u32 %v1021, 7
          %v1023 = vsub.s32 5, %v1022
          %v1024 = vrot.slane %v997, %v1023
          %v1025 = vlaneseq
          %v1026 = vshrl.u32 %v1025, 7
          %v1027 = vsub.s32 6, %v1026
          %v1028 = vrot.slane %v997, %v1027
          %v1029 = vlaneseq
          %v1030 = vshrl.u32 %v1029, 7
          %v1031 = vsub.s32 7, %v1030
          %v1032 = vrot.slane %v997, %v1031
          %v1033 = vlaneseq
          %v1034 = vshrl.u32 %v1033, 7
          %v1035 = vsub.s32 0, %v1034
          %v1036 = vrot.slane %v998, %v1035
          %v1037 = vlaneseq
          %v1038 = vshrl.u32 %v1037, 7
          %v1039 = vsub.s32 1, %v1038
          %v1040 = vrot.slane %v998, %v1039
          %v1041 = vlaneseq
          %v1042 = vshrl.u32 %v1041, 7
          %v1043 = vsub.s32 2, %v1042
          %v1044 = vrot.slane %v998, %v1043
          %v1045 = vlaneseq
          %v1046 = vshrl.u32 %v1045, 7
          %v1047 = vsub.s32 3, %v1046
          %v1048 = vrot.slane %v998, %v1047
          %v1049 = vlaneseq
          %v1050 = vshrl.u32 %v1049, 7
          %v1051 = vsub.s32 4, %v1050
          %v1052 = vrot.slane %v998, %v1051
          %v1053 = vlaneseq
          %v1054 = vshrl.u32 %v1053, 7
          %v1055 = vsub.s32 5, %v1054
          %v1056 = vrot.slane %v998, %v1055
          %v1057 = vlaneseq
          %v1058 = vshrl.u32 %v1057, 7
          %v1059 = vsub.s32 6, %v1058
          %v1060 = vrot.slane %v998, %v1059
          %v1061 = vlaneseq
          %v1062 = vshrl.u32 %v1061, 7
          %v1063 = vsub.s32 7, %v1062
          %v1064 = vrot.slane %v998, %v1063
          %vm1081 = vcmask 1040384
          %v1082 = vsel %vm1081, %v1004, 0.0
          %v1083 = vsel %vm1081, %v1008, 0.0
          %v1084 = vadd.f32 %v1082, %v1083
          %v1085 = vsel %vm1081, %v1012, 0.0
          %v1086 = vadd.f32 %v1084, %v1085
          %v1087 = vsel %vm1081, %v1016, 0.0
          %v1088 = vadd.f32 %v1086, %v1087
          %v1089 = vsel %vm1081, %v1020, 0.0
          %v1090 = vadd.f32 %v1088, %v1089
          %v1091 = vsel %vm1081, %v1024, 0.0
          %v1092 = vadd.f32 %v1090, %v1091
          %v1093 = vsel %vm1081, %v1028, 0.0
          %v1094 = vadd.f32 %v1092, %v1093
          %v1095 = vsel %vm1081, %v1032, 0.0
          %v1096 = vadd.f32 %v1094, %v1095
          %v1097 = vsel %vm1081, %v1036, 0.0
          %v1098 = vadd.f32 %v1096, %v1097
          %v1099 = vsel %vm1081, %v1040, 0.0
          %v1100 = vadd.f32 %v1098, %v1099
          %v1101 = vsel %vm1081, %v1044, 0.0
          %v1102 = vadd.f32 %v1100, %v1101
          %v1103 = vsel %vm1081, %v1048, 0.0
          %v1104 = vadd.f32 %v1102, %v1103
          %v1105 = vsel %vm1081, %v1052, 0.0
          %v1106 = vadd.f32 %v1104, %v1105
          %v1107 = vsel %vm1081, %v1056, 0.0
          %v1108 = vadd.f32 %v1106, %v1107
          %v1109 = vsel %vm1081, %v1060, 0.0
          %v1110 = vadd.f32 %v1108, %v1109
          %v1111 = vsel %vm1081, %v1064, 0.0
          %v1112 = vadd.f32 %v1110, %v1111
          %1113 = vadd.xlane.f32.xlu0 %v1112
          %v1114 = vpop.xlane.xlu0 %1113
          %v1115 = vlaneseq
          %v1116 = vshrl.u32 %v1115, 7
          %v1117 = vsub.s32 0, %v1116
          %v1118 = vrot.slane %v1114, %v1117
          %v1119 = vadd.f32 %v1118, 0.0
          %1120 = vst [vmem:[%s244] sm:$0xff] %v1119
        $region44: #{tpu_custom_call.1} parent=27 // pred_fallthru
          _
        %s1121 = sand.u32 %s119, 1
        %s1122 = scalar_lea.sflag [#allocation5], %s1121
        %s1123 = sand.u32 %s119, 1
        %s1124 = smul.addr %s1123, 8
        %s1125 = scalar_lea.vmem [#allocation8], %s1124
        // Predicated region
        $region45: #{tpu_custom_call.1} parent=27 // pred_check
          %p1126 = pneg %p129
        $region46: #{tpu_custom_call.1} parent=27 // pred_check_branch
          %1128 = sbr.rel (%p1126) target = $region48
        $region47: #{tpu_custom_call.1} parent=27 // pred_region
          %s1130 = ssub.s32 128, 128
          %1131 = vsyncadd %s1122, %s1130
          %s1132 = smul.addr %s27, 2
          %s1133 = sadd.s32 %s28, %s1132
          %s1134 = smul.addr %s1133, 128
          %s1135 = scalar_lea.hbm %s2, %s1134
          %s1137 = sshll.u32 %s1125, 4
          %s1138 = int_to_ptr.vmem [resolvable:$true] %s1137
          %1140 = dma.vmem_to_hbm [thread:$0]  %s1138, 128, %s1135, %s1122
        $region48: #{tpu_custom_call.1} parent=27 // pred_fallthru
          _
      $region28: #{tpu_custom_call.1} parent=5 // pred_fallthru
        _
      %p1141 = scmp.le.s32.totalorder 2, %s17
      // Predicated region
      $region49: #{tpu_custom_call.1} parent=5 // pred_check
        %p1142 = pneg %p1141
      $region50: #{tpu_custom_call.1} parent=5 // pred_check_branch
        %1144 = sbr.rel (%p1142) target = $region52
      $region51: #{tpu_custom_call.1} parent=5 // pred_region
        %s1145 = ssub.s32 %s17, 2
        // Predicated region
        $region53: #{tpu_custom_call.1} parent=51 // pred_check
          %p1146 = pneg %p135
        $region54: #{tpu_custom_call.1} parent=51 // pred_check_branch
          %1148 = sbr.rel (%p1146) target = $region56
        $region55: #{tpu_custom_call.1} parent=51 // pred_region
          %s1149 = sand.u32 %s120, 1
          %s1150 = scalar_lea.sflag [#allocation5], %s1149
          %s1151 = sand.u32 %s120, 1
          %s1152 = smul.addr %s1151, 8
          %s1153 = scalar_lea.vmem [#allocation8], %s1152
          %1154 = dma.done %s1150, 128
        $region56: #{tpu_custom_call.1} parent=51 // pred_fallthru
          _
      $region52: #{tpu_custom_call.1} parent=5 // pred_fallthru
        _
    $region6: #{tpu_custom_call.1} parent=1 // loop_footer
      %s21 = sadd.s32 1, %s17
    $region7: #{tpu_custom_call.1} parent=1 // loop_footer_branch
      %16 = sbr.rel target = $region3
    $region8: #{tpu_custom_call.1} parent=1 // loop_exit
      _
    %1155 = vsyncpa [#allocation4], 1
    %s1156 = scalar_lea.sflag [#allocation4], 1
    %1157 = vsyncpa %s1156, 1
    %1158 = vsyncpa [#allocation7], 1
    %s1159 = scalar_lea.sflag [#allocation7], 1
    %1160 = vsyncpa %s1159, 1
    %1161 = vsyncpa [#allocation5], 1
    %s1162 = scalar_lea.sflag [#allocation5], 1
    %1163 = vsyncpa %s1162, 1

</llo_original>
